<compile_context>
chip_gen: v6e
topology: v6e:2x2x1
jax: 0.10.0
libtpu: 0.0.40
codegen_flags: <defaults>
</compile_context>

<pallas_src>
import functools

import jax
import jax.numpy as jnp
from jax import lax
from jax.experimental import pallas as pl
from jax.experimental.pallas import tpu as pltpu


# ----------------------------------------------------------------------------
# Kernels
# ----------------------------------------------------------------------------
def _proj_kernel(x_ref, wq_ref, bq_ref, wk_ref, bk_ref, wv_ref, bv_ref,
                 q_ref, k_ref, v_ref, *, matmul_dtype, n_valid, tile_c,
                 mask_pad):
    """1x1-conv projections for one (batch, column-tile): Q, K, V = W @ x + b."""
    x = x_ref[0].astype(matmul_dtype)                                   # (C, Tc)
    q = jnp.dot(wq_ref[...], x, preferred_element_type=jnp.float32) + bq_ref[...]
    k = jnp.dot(wk_ref[...], x, preferred_element_type=jnp.float32) + bk_ref[...]
    v = jnp.dot(wv_ref[...], x, preferred_element_type=jnp.float32) + bv_ref[...]
    if mask_pad:
        # Zero the V columns that correspond to spatial padding: those softmax
        # rows then contribute nothing to the second matmul in pass 2.
        col = pl.program_id(1) * tile_c + lax.broadcasted_iota(jnp.int32, v.shape, 1)
        v = jnp.where(col < n_valid, v, 0.0)
    q_ref[0] = q.astype(matmul_dtype)
    k_ref[0] = k.astype(matmul_dtype)
    v_ref[0] = v.astype(matmul_dtype)


def _stats_kernel(q_ref, k_ref, lse_ref, *, n_valid, mask_pad):
    """Per softmax row i (one row tile): lse_i = max_j e_ij + log sum_j exp(.)."""
    # e[i, j] = sum_d Q[d, i] K[d, j]; the "Q^T" is fused into the contraction.
    e = lax.dot_general(q_ref[0], k_ref[0],
                        dimension_numbers=(((0,), (0,)), ((), ())),
                        preferred_element_type=jnp.float32)             # (Ti, Np)
    if mask_pad:
        col = lax.broadcasted_iota(jnp.int32, e.shape, 1)
        e = jnp.where(col < n_valid, e, -1e30)     # padded keys never participate
    m = jnp.max(e, axis=-1, keepdims=True)                               # (Ti, 1)
    l = jnp.sum(jnp.exp(e - m), axis=-1, keepdims=True)                  # f32 denom
    lse_ref[0] = m + jnp.log(l)


def _out_kernel(q_ref, k_ref, v_ref, lse_ref, x_ref, gamma_ref, o_ref, *,
                matmul_dtype):
    """One output-column tile: y[:, j_tile] = gamma * V @ softmax(e)[:, j_tile] + x."""
    # Energy columns for this output tile: (Np, Tj).
    e = lax.dot_general(q_ref[0], k_ref[0],
                        dimension_numbers=(((0,), (0,)), ((), ())),
                        preferred_element_type=jnp.float32)
    # e - lse <= 0 exactly for every real key (lse >= row max), so the clamp is
    # a no-op there; it only stops exp() overflow on padded key columns, which
    # the wrapper slices away.  p is already normalized -> no divide, no
    # (Ti, N) `attn` slab, no accumulator.
    p = jnp.exp(jnp.minimum(e - lse_ref[0], 0.0)).astype(matmul_dtype)   # (Np, Tj)
    out = jnp.dot(v_ref[0], p, preferred_element_type=jnp.float32)       # (C, Tj)
    y = gamma_ref[0] * out + x_ref[0].astype(jnp.float32)
    o_ref[0] = y.astype(o_ref.dtype)                                     # lane-dense


# ----------------------------------------------------------------------------
# Wrapper
# ----------------------------------------------------------------------------
def _pick_tile(n, pref):
    """Largest multiple of 128 dividing n that is <= pref (n itself if n <= pref)."""
    if n <= pref:
        return n
    t = (pref // 128) * 128
    while t >= 128:
        if n % t == 0:
            return t
        t -= 128
    return n


def _vmem_limit(estimate_bytes):
    """Working-set estimate + headroom, capped well below physical VMEM."""
    try:
        cap = int(pltpu.get_tpu_info().vmem_capacity_bytes)
    except Exception:
        cap = 64 * 1024 * 1024          # conservative fallback: v7x per-core VMEM
    return int(min(max(estimate_bytes + (8 << 20), 32 << 20), (cap * 3) // 4))


def self_attention(x_nchw, wq, bq, wk, bk, wv, bv, gamma, *,
                   tile_i=256, tile_j=256, tile_c=512, exact=False):
    """x_nchw: (B, C, W, H).  Torch-layout params:
       wq/wk: (C//8, C), bq/bk: (C//8,), wv: (C, C), bv: (C,), gamma: (1,).
       tile_i / tile_j default to 256 (v6e/v7x MXU shape); prefer 128 on v5e.
       exact=True -> f32 MXU operands everywhere (verification);
       default     -> bf16 MXU operands with f32 accumulation."""
    B, C, W, H = x_nchw.shape
    N = W * H
    C8 = wq.shape[0]

    matmul_dtype = jnp.float32 if exact else jnp.bfloat16
    it = jnp.dtype(matmul_dtype).itemsize
    xt = jnp.dtype(x_nchw.dtype).itemsize

    # Pad the flattened spatial axis up to a multiple of 128 so every block is
    # lane-aligned; padding is masked inside the kernels and sliced off at the
    # end (never a full (N, N) fallback slab).
    Np = ((N + 127) // 128) * 128
    pad = Np - N
    x_bcn = x_nchw.reshape(B, C, N)     # channel-major: no transpose needed
    if pad:
        x_bcn = jnp.pad(x_bcn, ((0, 0), (0, 0), (0, pad)))

    ti = _pick_tile(Np, tile_i)         # softmax-row tile (pass 1)
    tj = _pick_tile(Np, tile_j)         # output-column tile (pass 2)
    tc = _pick_tile(Np, tile_c)         # projection column tile (pass 0)

    w_q = wq.astype(matmul_dtype)
    w_k = wk.astype(matmul_dtype)
    w_v = wv.astype(matmul_dtype)
    b_q = bq.astype(jnp.float32).reshape(C8, 1)
    b_k = bk.astype(jnp.float32).reshape(C8, 1)
    b_v = bv.astype(jnp.float32).reshape(C, 1)
    gamma_s = gamma.astype(jnp.float32).reshape(1)

    rep = lambda b, t: (0, 0)
    par = ("parallel", "parallel")      # no cross-iteration state in any pass

    # ---- pass 0: 1x1-conv projections Q, K, V --------------------------------
    proj_vmem = (2 * xt * C * tc                     # x tile (double buffered)
                 + 2 * it * (2 * C8 * C + C * C)     # weights
                 + 2 * 4 * (2 * C8 + C)              # biases
                 + 2 * it * tc * (2 * C8 + C)        # q/k/v output tiles
                 + 4 * tc * (2 * C8 + C))            # f32 matmul temporaries
    proj_cost = pl.CostEstimate(
        flops=2 * B * Np * C * (2 * C8 + C), transcendentals=0,
        bytes_accessed=B * Np * (xt * C + it * (2 * C8 + C))
                       + it * C * (2 * C8 + C) + 4 * (2 * C8 + C))
    q_p, k_p, v_p = pl.pallas_call(
        functools.partial(_proj_kernel, matmul_dtype=matmul_dtype,
                          n_valid=N, tile_c=tc, mask_pad=bool(pad)),
        out_shape=(jax.ShapeDtypeStruct((B, C8, Np), matmul_dtype),
                   jax.ShapeDtypeStruct((B, C8, Np), matmul_dtype),
                   jax.ShapeDtypeStruct((B, C, Np), matmul_dtype)),
        grid_spec=pltpu.PrefetchScalarGridSpec(
            num_scalar_prefetch=0,
            grid=(B, Np // tc),
            in_specs=[
                pl.BlockSpec((1, C, tc), lambda b, t: (b, 0, t)),          # x
                pl.BlockSpec((C8, C), rep), pl.BlockSpec((C8, 1), rep),    # Wq, bq
                pl.BlockSpec((C8, C), rep), pl.BlockSpec((C8, 1), rep),    # Wk, bk
                pl.BlockSpec((C, C), rep), pl.BlockSpec((C, 1), rep),      # Wv, bv
            ],
            out_specs=(pl.BlockSpec((1, C8, tc), lambda b, t: (b, 0, t)),
                       pl.BlockSpec((1, C8, tc), lambda b, t: (b, 0, t)),
                       pl.BlockSpec((1, C, tc), lambda b, t: (b, 0, t)))),
        compiler_params=pltpu.CompilerParams(
            dimension_semantics=par, vmem_limit_bytes=_vmem_limit(proj_vmem)),
        cost_estimate=proj_cost,
    )(x_bcn, w_q, b_q, w_k, b_k, w_v, b_v)

    # ---- pass 1: per-row softmax statistics (log-sum-exp) --------------------
    stats_vmem = (2 * it * C8 * ti + 2 * it * C8 * Np   # Q tile, K (resident/batch)
                  + 2 * 4 * ti                          # lse output tile
                  + 2 * 4 * ti * Np)                    # energy + exp temporaries
    stats_cost = pl.CostEstimate(
        flops=2 * B * Np * Np * C8, transcendentals=B * Np * Np,
        bytes_accessed=B * (2 * it * C8 * Np + 4 * Np))
    lse = pl.pallas_call(
        functools.partial(_stats_kernel, n_valid=N, mask_pad=bool(pad)),
        out_shape=jax.ShapeDtypeStruct((B, Np, 1), jnp.float32),
        grid_spec=pltpu.PrefetchScalarGridSpec(
            num_scalar_prefetch=0,
            grid=(B, Np // ti),
            in_specs=[
                pl.BlockSpec((1, C8, ti), lambda b, i: (b, 0, i)),   # Q row tile
                pl.BlockSpec((1, C8, Np), lambda b, i: (b, 0, 0)),   # K (resident/batch)
            ],
            out_specs=pl.BlockSpec((1, ti, 1), lambda b, i: (b, i, 0))),
        compiler_params=pltpu.CompilerParams(
            dimension_semantics=par, vmem_limit_bytes=_vmem_limit(stats_vmem)),
        cost_estimate=stats_cost,
    )(q_p, k_p)

    # ---- pass 2: output-column tiles, streamed stores, no accumulator --------
    out_vmem = (2 * it * C8 * Np + 2 * it * C8 * tj      # Q (resident), K tile
                + 2 * it * C * Np + 2 * 4 * Np           # V (resident), lse
                + 2 * xt * C * tj + 2 * xt * C * tj      # x tile, out tile
                + 4 * Np * tj + it * Np * tj             # energy f32, p
                + 4 * C * tj)                            # f32 out temporary
    out_cost = pl.CostEstimate(
        flops=2 * B * Np * Np * (C8 + C), transcendentals=B * Np * Np,
        bytes_accessed=B * (it * Np * (2 * C8 + C) + 4 * Np + 2 * xt * C * Np))
    y_bcn = pl.pallas_call(
        functools.partial(_out_kernel, matmul_dtype=matmul_dtype),
        out_shape=jax.ShapeDtypeStruct((B, C, Np), x_nchw.dtype),
        grid_spec=pltpu.PrefetchScalarGridSpec(
            num_scalar_prefetch=0,
            grid=(B, Np // tj),
            in_specs=[
                pl.BlockSpec((1, C8, Np), lambda b, j: (b, 0, 0)),   # Q (resident/batch)
                pl.BlockSpec((1, C8, tj), lambda b, j: (b, 0, j)),   # K column tile
                pl.BlockSpec((1, C, Np), lambda b, j: (b, 0, 0)),    # V (resident/batch)
                pl.BlockSpec((1, Np, 1), lambda b, j: (b, 0, 0)),    # lse (resident/batch)
                pl.BlockSpec((1, C, tj), lambda b, j: (b, 0, j)),    # x (residual)
                pl.BlockSpec(memory_space=pltpu.MemorySpace.SMEM),   # gamma scalar
            ],
            out_specs=pl.BlockSpec((1, C, tj), lambda b, j: (b, 0, j))),
        compiler_params=pltpu.CompilerParams(
            dimension_semantics=par, vmem_limit_bytes=_vmem_limit(out_vmem)),
        cost_estimate=out_cost,
    )(q_p, k_p, v_p, lse, x_bcn, gamma_s)

    if pad:
        y_bcn = y_bcn[:, :, :N]
    return y_bcn.reshape(B, C, W, H)


# ----------------------------------------------------------------------------
# Pure-JAX reference (mirrors the PyTorch forward exactly)
# ----------------------------------------------------------------------------
def _reference(x, wq, bq, wk, bk, wv, bv, gamma):
    B, C, W, H = x.shape
    N = W * H
    hp = lax.Precision.HIGHEST
    xf = x.reshape(B, C, N)
    q = jnp.einsum('dc,bcn->bdn', wq, xf, precision=hp) + bq[None, :, None]
    k = jnp.einsum('dc,bcn->bdn', wk, xf, precision=hp) + bk[None, :, None]
    v = jnp.einsum('dc,bcn->bdn', wv, xf, precision=hp) + bv[None, :, None]
    energy = jnp.einsum('bdi,bdj->bij', q, k, precision=hp)
    attn = jax.nn.softmax(energy, axis=-1)
    out = jnp.einsum('bci,bij->bcj', v, attn, precision=hp)
    return gamma[0] * out.reshape(B, C, W, H) + x


if __name__ == "__main__":
    key = jax.random.PRNGKey(0)
    B, C, W, H = 2, 32, 16, 16            # N = 256: lane-aligned, no padding
    C8 = C // 8

    ks = jax.random.split(key, 8)
    x = jax.random.normal(ks[0], (B, C, W, H), jnp.float32)
    wq = jax.random.normal(ks[1], (C8, C), jnp.float32) * 0.1
    bq = jax.random.normal(ks[2], (C8,), jnp.float32) * 0.1
    wk = jax.random.normal(ks[3], (C8, C), jnp.float32) * 0.1
    bk = jax.random.normal(ks[4], (C8,), jnp.float32) * 0.1
    wv = jax.random.normal(ks[5], (C, C), jnp.float32) * 0.1
    bv = jax.random.normal(ks[6], (C,), jnp.float32) * 0.1
    # PyTorch inits gamma to 0; use a nonzero value so the attention path matters.
    gamma = jnp.full((1,), 0.5, jnp.float32)

    y_ref = _reference(x, wq, bq, wk, bk, wv, bv, gamma)

    # Fast path: bf16 MXU operands with f32 accumulation.
    y_fast = jax.block_until_ready(self_attention(x, wq, bq, wk, bk, wv, bv, gamma))
    assert jnp.allclose(y_fast, y_ref, atol=3e-2, rtol=3e-2), "fast path mismatch"

    # Exact path: f32 operands everywhere, same kernel structure.
    y_exact = jax.block_until_ready(
        self_attention(x, wq, bq, wk, bk, wv, bv, gamma, exact=True))
    assert jnp.allclose(y_exact, y_ref, atol=3e-3, rtol=3e-3), "exact path mismatch"

    # Non-multiple-of-128 spatial size exercises the padding/masking path.
    W2, H2 = 10, 10                        # N = 100 -> padded to 128 internally
    x2 = jax.random.normal(ks[7], (B, C, W2, H2), jnp.float32)
    y2_ref = _reference(x2, wq, bq, wk, bk, wv, bv, gamma)
    y2_fast = jax.block_until_ready(
        self_attention(x2, wq, bq, wk, bk, wv, bv, gamma))
    assert jnp.allclose(y2_fast, y2_ref, atol=3e-2, rtol=3e-2), "padded fast mismatch"
    y2_exact = jax.block_until_ready(
        self_attention(x2, wq, bq, wk, bk, wv, bv, gamma, exact=True))
    assert jnp.allclose(y2_exact, y2_ref, atol=3e-3, rtol=3e-3), "padded exact mismatch"

    print("KERNEL_OK")
</pallas_src>

<mosaic_0001>
module attributes {stable_mosaic.version = 11 : i64} {
  func.func @_proj_kernel(%arg0: i32, %arg1: i32, %arg2: memref<1x32x256xf32, #tpu.memory_space<vmem>>, %arg3: memref<4x32xbf16, #tpu.memory_space<vmem>>, %arg4: memref<4x1xf32, #tpu.memory_space<vmem>>, %arg5: memref<4x32xbf16, #tpu.memory_space<vmem>>, %arg6: memref<4x1xf32, #tpu.memory_space<vmem>>, %arg7: memref<32x32xbf16, #tpu.memory_space<vmem>>, %arg8: memref<32x1xf32, #tpu.memory_space<vmem>>, %arg9: memref<1x4x256xbf16, #tpu.memory_space<vmem>>, %arg10: memref<1x4x256xbf16, #tpu.memory_space<vmem>>, %arg11: memref<1x32x256xbf16, #tpu.memory_space<vmem>>) attributes {dimension_semantics = [#tpu.dimension_semantics<parallel>, #tpu.dimension_semantics<parallel>], iteration_bounds = array<i64: 2, 1>, scalar_prefetch = 0 : i64, scratch_operands = 0 : i64, tpu.core_type = #tpu.core_type<tc>, window_params = [{transform_indices = @transform_0, window_bounds = array<i64: 1, 32, 256>}, {pipeline_mode = #tpu.pipeline_mode<synchronous>, transform_indices = @transform_1, window_bounds = array<i64: 4, 32>}, {pipeline_mode = #tpu.pipeline_mode<synchronous>, transform_indices = @transform_2, window_bounds = array<i64: 4, 1>}, {pipeline_mode = #tpu.pipeline_mode<synchronous>, transform_indices = @transform_3, window_bounds = array<i64: 4, 32>}, {pipeline_mode = #tpu.pipeline_mode<synchronous>, transform_indices = @transform_4, window_bounds = array<i64: 4, 1>}, {pipeline_mode = #tpu.pipeline_mode<synchronous>, transform_indices = @transform_5, window_bounds = array<i64: 32, 32>}, {pipeline_mode = #tpu.pipeline_mode<synchronous>, transform_indices = @transform_6, window_bounds = array<i64: 32, 1>}, {transform_indices = @transform_7, window_bounds = array<i64: 1, 4, 256>}, {transform_indices = @transform_8, window_bounds = array<i64: 1, 4, 256>}, {transform_indices = @transform_9, window_bounds = array<i64: 1, 32, 256>}]} {
    %c0 = arith.constant 0 : index
    %c0_0 = arith.constant 0 : index
    %c0_1 = arith.constant 0 : index
    %0 = vector.load %arg2[%c0, %c0_0, %c0_1] : memref<1x32x256xf32, #tpu.memory_space<vmem>>, vector<1x32x256xf32>
    %1 = vector.shape_cast %0 : vector<1x32x256xf32> to vector<32x256xf32>
    %2 = arith.truncf %1 : vector<32x256xf32> to vector<32x256xbf16>
    %c0_2 = arith.constant 0 : index
    %c0_3 = arith.constant 0 : index
    %3 = vector.load %arg3[%c0_2, %c0_3] : memref<4x32xbf16, #tpu.memory_space<vmem>>, vector<4x32xbf16>
    %cst = arith.constant dense<0.000000e+00> : vector<4x256xf32>
    %4 = tpu.matmul %3, %2, %cst {dimension_numbers = #tpu.dot_dimension_numbers<[1], [0], [0], [1], [0, 0, 1, 1], [], []>} : vector<4x32xbf16>, vector<32x256xbf16>, vector<4x256xf32> -> vector<4x256xf32>
    %c0_4 = arith.constant 0 : index
    %c0_5 = arith.constant 0 : index
    %5 = vector.load %arg4[%c0_4, %c0_5] : memref<4x1xf32, #tpu.memory_space<vmem>>, vector<4x1xf32>
    %6 = vector.broadcast %5 : vector<4x1xf32> to vector<4x256xf32>
    %7 = arith.addf %4, %6 : vector<4x256xf32>
    %c0_6 = arith.constant 0 : index
    %c0_7 = arith.constant 0 : index
    %8 = vector.load %arg5[%c0_6, %c0_7] : memref<4x32xbf16, #tpu.memory_space<vmem>>, vector<4x32xbf16>
    %cst_8 = arith.constant dense<0.000000e+00> : vector<4x256xf32>
    %9 = tpu.matmul %8, %2, %cst_8 {dimension_numbers = #tpu.dot_dimension_numbers<[1], [0], [0], [1], [0, 0, 1, 1], [], []>} : vector<4x32xbf16>, vector<32x256xbf16>, vector<4x256xf32> -> vector<4x256xf32>
    %c0_9 = arith.constant 0 : index
    %c0_10 = arith.constant 0 : index
    %10 = vector.load %arg6[%c0_9, %c0_10] : memref<4x1xf32, #tpu.memory_space<vmem>>, vector<4x1xf32>
    %11 = vector.broadcast %10 : vector<4x1xf32> to vector<4x256xf32>
    %12 = arith.addf %9, %11 : vector<4x256xf32>
    %c0_11 = arith.constant 0 : index
    %c0_12 = arith.constant 0 : index
    %13 = vector.load %arg7[%c0_11, %c0_12] : memref<32x32xbf16, #tpu.memory_space<vmem>>, vector<32x32xbf16>
    %cst_13 = arith.constant dense<0.000000e+00> : vector<32x256xf32>
    %14 = tpu.matmul %13, %2, %cst_13 {dimension_numbers = #tpu.dot_dimension_numbers<[1], [0], [0], [1], [0, 0, 1, 1], [], []>} : vector<32x32xbf16>, vector<32x256xbf16>, vector<32x256xf32> -> vector<32x256xf32>
    %c0_14 = arith.constant 0 : index
    %c0_15 = arith.constant 0 : index
    %15 = vector.load %arg8[%c0_14, %c0_15] : memref<32x1xf32, #tpu.memory_space<vmem>>, vector<32x1xf32>
    %16 = vector.broadcast %15 : vector<32x1xf32> to vector<32x256xf32>
    %17 = arith.addf %14, %16 : vector<32x256xf32>
    %18 = arith.truncf %7 : vector<4x256xf32> to vector<4x256xbf16>
    %c0_16 = arith.constant 0 : index
    %c0_17 = arith.constant 0 : index
    %c0_18 = arith.constant 0 : index
    %19 = vector.load %arg9[%c0_16, %c0_17, %c0_18] : memref<1x4x256xbf16, #tpu.memory_space<vmem>>, vector<1x4x256xbf16>
    %20 = vector.shape_cast %19 : vector<1x4x256xbf16> to vector<4x256xbf16>
    %21 = vector.shape_cast %18 : vector<4x256xbf16> to vector<1x4x256xbf16>
    tpu.vector_store %arg9[%c0_16, %c0_17, %c0_18], %21 {strides = array<i32>} : memref<1x4x256xbf16, #tpu.memory_space<vmem>>, vector<1x4x256xbf16>,
    %22 = arith.truncf %12 : vector<4x256xf32> to vector<4x256xbf16>
    %c0_19 = arith.constant 0 : index
    %c0_20 = arith.constant 0 : index
    %c0_21 = arith.constant 0 : index
    %23 = vector.load %arg10[%c0_19, %c0_20, %c0_21] : memref<1x4x256xbf16, #tpu.memory_space<vmem>>, vector<1x4x256xbf16>
    %24 = vector.shape_cast %23 : vector<1x4x256xbf16> to vector<4x256xbf16>
    %25 = vector.shape_cast %22 : vector<4x256xbf16> to vector<1x4x256xbf16>
    tpu.vector_store %arg10[%c0_19, %c0_20, %c0_21], %25 {strides = array<i32>} : memref<1x4x256xbf16, #tpu.memory_space<vmem>>, vector<1x4x256xbf16>,
    %26 = arith.truncf %17 : vector<32x256xf32> to vector<32x256xbf16>
    %c0_22 = arith.constant 0 : index
    %c0_23 = arith.constant 0 : index
    %c0_24 = arith.constant 0 : index
    %27 = vector.load %arg11[%c0_22, %c0_23, %c0_24] : memref<1x32x256xbf16, #tpu.memory_space<vmem>>, vector<1x32x256xbf16>
    %28 = vector.shape_cast %27 : vector<1x32x256xbf16> to vector<32x256xbf16>
    %29 = vector.shape_cast %26 : vector<32x256xbf16> to vector<1x32x256xbf16>
    tpu.vector_store %arg11[%c0_22, %c0_23, %c0_24], %29 {strides = array<i32>} : memref<1x32x256xbf16, #tpu.memory_space<vmem>>, vector<1x32x256xbf16>,
    return
  }
  func.func @transform_0(%arg0: i32, %arg1: i32) -> (i32, i32, i32) {
    %c0_i32 = arith.constant 0 : i32
    %c0_i32_0 = arith.constant 0 : i32
    return %arg0, %c0_i32, %arg1 : i32, i32, i32
  }
  func.func @transform_1(%arg0: i32, %arg1: i32) -> (i32, i32) {
    %c0_i32 = arith.constant 0 : i32
    %c0_i32_0 = arith.constant 0 : i32
    %c0_i32_1 = arith.constant 0 : i32
    return %c0_i32, %c0_i32_0 : i32, i32
  }
  func.func @transform_2(%arg0: i32, %arg1: i32) -> (i32, i32) {
    %c0_i32 = arith.constant 0 : i32
    %c0_i32_0 = arith.constant 0 : i32
    %c0_i32_1 = arith.constant 0 : i32
    return %c0_i32, %c0_i32_0 : i32, i32
  }
  func.func @transform_3(%arg0: i32, %arg1: i32) -> (i32, i32) {
    %c0_i32 = arith.constant 0 : i32
    %c0_i32_0 = arith.constant 0 : i32
    %c0_i32_1 = arith.constant 0 : i32
    return %c0_i32, %c0_i32_0 : i32, i32
  }
  func.func @transform_4(%arg0: i32, %arg1: i32) -> (i32, i32) {
    %c0_i32 = arith.constant 0 : i32
    %c0_i32_0 = arith.constant 0 : i32
    %c0_i32_1 = arith.constant 0 : i32
    return %c0_i32, %c0_i32_0 : i32, i32
  }
  func.func @transform_5(%arg0: i32, %arg1: i32) -> (i32, i32) {
    %c0_i32 = arith.constant 0 : i32
    %c0_i32_0 = arith.constant 0 : i32
    %c0_i32_1 = arith.constant 0 : i32
    return %c0_i32, %c0_i32_0 : i32, i32
  }
  func.func @transform_6(%arg0: i32, %arg1: i32) -> (i32, i32) {
    %c0_i32 = arith.constant 0 : i32
    %c0_i32_0 = arith.constant 0 : i32
    %c0_i32_1 = arith.constant 0 : i32
    return %c0_i32, %c0_i32_0 : i32, i32
  }
  func.func @transform_7(%arg0: i32, %arg1: i32) -> (i32, i32, i32) {
    %c0_i32 = arith.constant 0 : i32
    %c0_i32_0 = arith.constant 0 : i32
    return %arg0, %c0_i32, %arg1 : i32, i32, i32
  }
  func.func @transform_8(%arg0: i32, %arg1: i32) -> (i32, i32, i32) {
    %c0_i32 = arith.constant 0 : i32
    %c0_i32_0 = arith.constant 0 : i32
    return %arg0, %c0_i32, %arg1 : i32, i32, i32
  }
  func.func @transform_9(%arg0: i32, %arg1: i32) -> (i32, i32, i32) {
    %c0_i32 = arith.constant 0 : i32
    %c0_i32_0 = arith.constant 0 : i32
    return %arg0, %c0_i32, %arg1 : i32, i32, i32
  }
}

</mosaic_0001>

<llo_original>
// kernel: tpu_custom_call.1
$region0: #{tpu_custom_call.1}
  #allocation0 [shape = 'u32[]', space=smem, size = 0x4, offset = 0x4, fixed_abs, tag = 'smem constant byte address 0x4 - core index']
  #allocation1 [shape = 'u32[144,128]{1,0:T(1,128)}', space=vmem, size = 0x12000, scoped, tag = 'internal scratch']
  %s0 = inlined_call_operand.hbm [shape: f32[2,32,256], index: 0, kind: input, shape index: {}]
  %s1 = inlined_call_operand.vmem [shape: bf16[4,32], index: 1, kind: input, shape index: {}]
  %s2 = inlined_call_operand.vmem [shape: f32[4,1], index: 2, kind: input, shape index: {}]
  %s3 = inlined_call_operand.vmem [shape: bf16[4,32], index: 3, kind: input, shape index: {}]
  %s4 = inlined_call_operand.vmem [shape: f32[4,1], index: 4, kind: input, shape index: {}]
  %s5 = inlined_call_operand.vmem [shape: bf16[32,32], index: 5, kind: input, shape index: {}]
  %s6 = inlined_call_operand.vmem [shape: f32[32,1], index: 6, kind: input, shape index: {}]
  %s7 = inlined_call_operand.hbm [shape: bf16[2,4,256], index: 7, kind: output, shape index: {0}]
  %s8 = inlined_call_operand.hbm [shape: bf16[2,4,256], index: 8, kind: output, shape index: {1}]
  %s9 = inlined_call_operand.hbm [shape: bf16[2,32,256], index: 9, kind: output, shape index: {2}]
  %10 = xla_tuple %s7, %s8, %s9
  %s11 = sld [smem:[#allocation0]]
  $region81: #{tpu_custom_call.1} parent=0
    _
  %s13 = ssub.s32 1, %s11
  %s14 = scalar_select 0, %s13, %s11
  $region1: #{tpu_custom_call.1} parent=0
    #allocation2 [shape = 'u8[65536]{0}', space=vmem, size = 0x10000, scoped, tag = 'input window, operand 0']
    #allocation3 [shape = 's32[2]{0}', space=sflag, size = 0x8, scoped, tag = 'scoped memory for tpu_custom_call.1']
    #allocation4 [shape = 's32[2]{0}', space=sflag, size = 0x8, scoped, tag = 'scoped memory for tpu_custom_call.1']
    #allocation5 [shape = 'u8[4096]{0}', space=vmem, size = 0x1000, scoped, tag = 'output window, operand 0']
    #allocation6 [shape = 'u8[4096]{0}', space=vmem, size = 0x1000, scoped, tag = 'output window, operand 1']
    #allocation7 [shape = 's32[2]{0}', space=sflag, size = 0x8, scoped, tag = 'scoped memory for tpu_custom_call.1']
    #allocation8 [shape = 'u8[32768]{0}', space=vmem, size = 0x8000, scoped, tag = 'output window, operand 2']
    %15 = vsyncpa [#allocation3], 0
    %s16 = scalar_lea.sflag [#allocation3], 1
    %17 = vsyncpa %s16, 0
    %18 = vsyncpa [#allocation4], 0
    %s19 = scalar_lea.sflag [#allocation4], 1
    %20 = vsyncpa %s19, 0
    %21 = vsyncpa [#allocation7], 0
    %s22 = scalar_lea.sflag [#allocation7], 1
    %23 = vsyncpa %s22, 0
    loop: start=0, step=1, limit=4
    $region2: #{tpu_custom_call.1} parent=1 // loop_pre_header
      _
    $region3: #{tpu_custom_call.1} parent=1 // loop_header
      %s25 = sphi 0, %s29
      %p26 = scmp.ge.s32.totalorder %s25, 4
      %s32 = sphi 0, %s44
      %s33 = sphi 0, %s40
      %s34 = sphi 0, %s32
      %s35 = sphi 0, %s33
      %s36 = sphi 0, %s34
      %s37 = sphi 0, %s35
      %s49 = sphi 0, %s51
      %s52 = sphi 0, %s49
      %s53 = sphi 0, %s52
      %s69 = sphi 0, %s53
      %s73 = sphi 0, %s73
      %s75 = sphi 0, %s73
      %s76 = sphi 0, %s75
      %s90 = sphi 0, %s76
      %s94 = sphi 0, %s94
      %s96 = sphi 0, %s94
      %s97 = sphi 0, %s96
      %s111 = sphi 0, %s97
      %s115 = sphi 0, %s115
      %s117 = sphi 0, %s115
      %s118 = sphi 0, %s117
      %s132 = sphi 0, %s118
      %s136 = sphi 0, %s136
      %s138 = sphi 0, %s136
      %s139 = sphi 0, %s138
      %s153 = sphi 0, %s139
      %s157 = sphi 0, %s157
      %s159 = sphi 0, %s157
      %s160 = sphi 0, %s159
      %s174 = sphi 0, %s160
      %s178 = sphi 0, %s178
      %s180 = sphi 0, %s178
      %s181 = sphi 0, %s180
      %s195 = sphi 0, %s181
      %s203 = sphi 0, %s205
      %s206 = sphi 0, %s203
      %s207 = sphi 0, %s206
      %s223 = sphi 0, %s207
      %s231 = sphi 0, %s233
      %s234 = sphi 0, %s231
      %s235 = sphi 0, %s234
      %s251 = sphi 0, %s235
      %s259 = sphi 0, %s261
      %s262 = sphi 0, %s259
      %s263 = sphi 0, %s262
      %s279 = sphi 0, %s263
    $region4: #{tpu_custom_call.1} parent=1 // loop_header_branch
      %28 = sbr.rel (%p26) target = $region8
    $region5: #{tpu_custom_call.1} parent=1 // loop_body
      %s30 = ssub.s32 %s25, 1
      %s31 = ssub.s32 %s25, 2
      %s38 = sadd.s32 1, %s33
      %p39 = scmp.ge.s32.totalorder %s38, 1
      %s40 = scalar_select %p39, 0, %s38
      %s41 = sadd.s32 1, %s32
      %s42 = scalar_select %p39, %s41, %s32
      %p43 = scmp.ge.s32.totalorder %s42, 2
      %s44 = scalar_select %p43, 0, %s42
      %s45 = ssub.s32 %s32, %s44
      %s46 = ssub.s32 %s33, %s40
      %s47 = sor.u32 %s45, %s46
      %p48 = scmp.eq.s32.totalorder %s47, 0
      %s50 = sadd.s32 %s49, 1
      %s51 = scalar_select %p48, %s49, %s50
      %p54 = pneg %p48
      %p55 = scmp.eq.s32.totalorder %s25, 1
      %p56 = por %p54, %p55
      %p57 = scmp.ne.s32.totalorder %s49, %s52
      %p58 = scmp.eq.s32.totalorder %s25, 0
      %p59 = por %p57, %p58
      %p60 = scmp.ne.s32.totalorder %s49, %s52
      %p61 = scmp.eq.s32.totalorder %s30, 1
      %p62 = por %p60, %p61
      %p63 = scmp.ne.s32.totalorder %s52, %s53
      %p64 = scmp.eq.s32.totalorder %s30, 0
      %p65 = por %p63, %p64
      %p66 = scmp.ne.s32.totalorder %s52, %s53
      %p67 = scmp.eq.s32.totalorder %s31, 1
      %p68 = por %p66, %p67
      %p70 = scmp.ne.s32.totalorder %s53, %s69
      %p71 = scmp.eq.s32.totalorder %s31, 0
      %p72 = por %p70, %p71
      %s74 = sadd.s32 %s73, 1
      %p77 = scmp.eq.s32.totalorder %s25, 1
      %p78 = scmp.ne.s32.totalorder %s73, %s75
      %p79 = scmp.eq.s32.totalorder %s25, 0
      %p80 = por %p78, %p79
      %p81 = scmp.ne.s32.totalorder %s73, %s75
      %p82 = scmp.eq.s32.totalorder %s30, 1
      %p83 = por %p81, %p82
      %p84 = scmp.ne.s32.totalorder %s75, %s76
      %p85 = scmp.eq.s32.totalorder %s30, 0
      %p86 = por %p84, %p85
      %p87 = scmp.ne.s32.totalorder %s75, %s76
      %p88 = scmp.eq.s32.totalorder %s31, 1
      %p89 = por %p87, %p88
      %p91 = scmp.ne.s32.totalorder %s76, %s90
      %p92 = scmp.eq.s32.totalorder %s31, 0
      %p93 = por %p91, %p92
      %s95 = sadd.s32 %s94, 1
      %p98 = scmp.eq.s32.totalorder %s25, 1
      %p99 = scmp.ne.s32.totalorder %s94, %s96
      %p100 = scmp.eq.s32.totalorder %s25, 0
      %p101 = por %p99, %p100
      %p102 = scmp.ne.s32.totalorder %s94, %s96
      %p103 = scmp.eq.s32.totalorder %s30, 1
      %p104 = por %p102, %p103
      %p105 = scmp.ne.s32.totalorder %s96, %s97
      %p106 = scmp.eq.s32.totalorder %s30, 0
      %p107 = por %p105, %p106
      %p108 = scmp.ne.s32.totalorder %s96, %s97
      %p109 = scmp.eq.s32.totalorder %s31, 1
      %p110 = por %p108, %p109
      %p112 = scmp.ne.s32.totalorder %s97, %s111
      %p113 = scmp.eq.s32.totalorder %s31, 0
      %p114 = por %p112, %p113
      %s116 = sadd.s32 %s115, 1
      %p119 = scmp.eq.s32.totalorder %s25, 1
      %p120 = scmp.ne.s32.totalorder %s115, %s117
      %p121 = scmp.eq.s32.totalorder %s25, 0
      %p122 = por %p120, %p121
      %p123 = scmp.ne.s32.totalorder %s115, %s117
      %p124 = scmp.eq.s32.totalorder %s30, 1
      %p125 = por %p123, %p124
      %p126 = scmp.ne.s32.totalorder %s117, %s118
      %p127 = scmp.eq.s32.totalorder %s30, 0
      %p128 = por %p126, %p127
      %p129 = scmp.ne.s32.totalorder %s117, %s118
      %p130 = scmp.eq.s32.totalorder %s31, 1
      %p131 = por %p129, %p130
      %p133 = scmp.ne.s32.totalorder %s118, %s132
      %p134 = scmp.eq.s32.totalorder %s31, 0
      %p135 = por %p133, %p134
      %s137 = sadd.s32 %s136, 1
      %p140 = scmp.eq.s32.totalorder %s25, 1
      %p141 = scmp.ne.s32.totalorder %s136, %s138
      %p142 = scmp.eq.s32.totalorder %s25, 0
      %p143 = por %p141, %p142
      %p144 = scmp.ne.s32.totalorder %s136, %s138
      %p145 = scmp.eq.s32.totalorder %s30, 1
      %p146 = por %p144, %p145
      %p147 = scmp.ne.s32.totalorder %s138, %s139
      %p148 = scmp.eq.s32.totalorder %s30, 0
      %p149 = por %p147, %p148
      %p150 = scmp.ne.s32.totalorder %s138, %s139
      %p151 = scmp.eq.s32.totalorder %s31, 1
      %p152 = por %p150, %p151
      %p154 = scmp.ne.s32.totalorder %s139, %s153
      %p155 = scmp.eq.s32.totalorder %s31, 0
      %p156 = por %p154, %p155
      %s158 = sadd.s32 %s157, 1
      %p161 = scmp.eq.s32.totalorder %s25, 1
      %p162 = scmp.ne.s32.totalorder %s157, %s159
      %p163 = scmp.eq.s32.totalorder %s25, 0
      %p164 = por %p162, %p163
      %p165 = scmp.ne.s32.totalorder %s157, %s159
      %p166 = scmp.eq.s32.totalorder %s30, 1
      %p167 = por %p165, %p166
      %p168 = scmp.ne.s32.totalorder %s159, %s160
      %p169 = scmp.eq.s32.totalorder %s30, 0
      %p170 = por %p168, %p169
      %p171 = scmp.ne.s32.totalorder %s159, %s160
      %p172 = scmp.eq.s32.totalorder %s31, 1
      %p173 = por %p171, %p172
      %p175 = scmp.ne.s32.totalorder %s160, %s174
      %p176 = scmp.eq.s32.totalorder %s31, 0
      %p177 = por %p175, %p176
      %s179 = sadd.s32 %s178, 1
      %p182 = scmp.eq.s32.totalorder %s25, 1
      %p183 = scmp.ne.s32.totalorder %s178, %s180
      %p184 = scmp.eq.s32.totalorder %s25, 0
      %p185 = por %p183, %p184
      %p186 = scmp.ne.s32.totalorder %s178, %s180
      %p187 = scmp.eq.s32.totalorder %s30, 1
      %p188 = por %p186, %p187
      %p189 = scmp.ne.s32.totalorder %s180, %s181
      %p190 = scmp.eq.s32.totalorder %s30, 0
      %p191 = por %p189, %p190
      %p192 = scmp.ne.s32.totalorder %s180, %s181
      %p193 = scmp.eq.s32.totalorder %s31, 1
      %p194 = por %p192, %p193
      %p196 = scmp.ne.s32.totalorder %s181, %s195
      %p197 = scmp.eq.s32.totalorder %s31, 0
      %p198 = por %p196, %p197
      %s199 = ssub.s32 %s32, %s44
      %s200 = ssub.s32 %s33, %s40
      %s201 = sor.u32 %s199, %s200
      %p202 = scmp.eq.s32.totalorder %s201, 0
      %s204 = sadd.s32 %s203, 1
      %s205 = scalar_select %p202, %s203, %s204
      %p208 = pneg %p202
      %p209 = scmp.eq.s32.totalorder %s25, 1
      %p210 = por %p208, %p209
      %p211 = scmp.ne.s32.totalorder %s203, %s206
      %p212 = scmp.eq.s32.totalorder %s25, 0
      %p213 = por %p211, %p212
      %p214 = scmp.ne.s32.totalorder %s203, %s206
      %p215 = scmp.eq.s32.totalorder %s30, 1
      %p216 = por %p214, %p215
      %p217 = scmp.ne.s32.totalorder %s206, %s207
      %p218 = scmp.eq.s32.totalorder %s30, 0
      %p219 = por %p217, %p218
      %p220 = scmp.ne.s32.totalorder %s206, %s207
      %p221 = scmp.eq.s32.totalorder %s31, 1
      %p222 = por %p220, %p221
      %p224 = scmp.ne.s32.totalorder %s207, %s223
      %p225 = scmp.eq.s32.totalorder %s31, 0
      %p226 = por %p224, %p225
      %s227 = ssub.s32 %s32, %s44
      %s228 = ssub.s32 %s33, %s40
      %s229 = sor.u32 %s227, %s228
      %p230 = scmp.eq.s32.totalorder %s229, 0
      %s232 = sadd.s32 %s231, 1
      %s233 = scalar_select %p230, %s231, %s232
      %p236 = pneg %p230
      %p237 = scmp.eq.s32.totalorder %s25, 1
      %p238 = por %p236, %p237
      %p239 = scmp.ne.s32.totalorder %s231, %s234
      %p240 = scmp.eq.s32.totalorder %s25, 0
      %p241 = por %p239, %p240
      %p242 = scmp.ne.s32.totalorder %s231, %s234
      %p243 = scmp.eq.s32.totalorder %s30, 1
      %p244 = por %p242, %p243
      %p245 = scmp.ne.s32.totalorder %s234, %s235
      %p246 = scmp.eq.s32.totalorder %s30, 0
      %p247 = por %p245, %p246
      %p248 = scmp.ne.s32.totalorder %s234, %s235
      %p249 = scmp.eq.s32.totalorder %s31, 1
      %p250 = por %p248, %p249
      %p252 = scmp.ne.s32.totalorder %s235, %s251
      %p253 = scmp.eq.s32.totalorder %s31, 0
      %p254 = por %p252, %p253
      %s255 = ssub.s32 %s32, %s44
      %s256 = ssub.s32 %s33, %s40
      %s257 = sor.u32 %s255, %s256
      %p258 = scmp.eq.s32.totalorder %s257, 0
      %s260 = sadd.s32 %s259, 1
      %s261 = scalar_select %p258, %s259, %s260
      %p264 = pneg %p258
      %p265 = scmp.eq.s32.totalorder %s25, 1
      %p266 = por %p264, %p265
      %p267 = scmp.ne.s32.totalorder %s259, %s262
      %p268 = scmp.eq.s32.totalorder %s25, 0
      %p269 = por %p267, %p268
      %p270 = scmp.ne.s32.totalorder %s259, %s262
      %p271 = scmp.eq.s32.totalorder %s30, 1
      %p272 = por %p270, %p271
      %p273 = scmp.ne.s32.totalorder %s262, %s263
      %p274 = scmp.eq.s32.totalorder %s30, 0
      %p275 = por %p273, %p274
      %p276 = scmp.ne.s32.totalorder %s262, %s263
      %p277 = scmp.eq.s32.totalorder %s31, 1
      %p278 = por %p276, %p277
      %p280 = scmp.ne.s32.totalorder %s263, %s279
      %p281 = scmp.eq.s32.totalorder %s31, 0
      %p282 = por %p280, %p281
      %p283 = scmp.le.s32.totalorder 1, %s25
      %p284 = scmp.lt.s32.totalorder %s25, 3
      %p285 = pnand %p283, %p284
      %p286 = pneg %p285
      // Predicated region
      $region9: #{tpu_custom_call.1} parent=5 // pred_check
        _
      $region10: #{tpu_custom_call.1} parent=5 // pred_check_branch
        %288 = sbr.rel (%p285) target = $region12
      $region11: #{tpu_custom_call.1} parent=5 // pred_region
        %s289 = ssub.s32 %s25, 1
        // Predicated region
        $region13: #{tpu_custom_call.1} parent=11 // pred_check
          %p290 = pneg %p86
        $region14: #{tpu_custom_call.1} parent=11 // pred_check_branch
          %292 = sbr.rel (%p290) target = $region16
        $region15: #{tpu_custom_call.1} parent=11 // pred_region
          _
        $region16: #{tpu_custom_call.1} parent=11 // pred_fallthru
          _
        // Predicated region
        $region17: #{tpu_custom_call.1} parent=11 // pred_check
          %p293 = pneg %p107
        $region18: #{tpu_custom_call.1} parent=11 // pred_check_branch
          %295 = sbr.rel (%p293) target = $region20
        $region19: #{tpu_custom_call.1} parent=11 // pred_region
          _
        $region20: #{tpu_custom_call.1} parent=11 // pred_fallthru
          _
        // Predicated region
        $region21: #{tpu_custom_call.1} parent=11 // pred_check
          %p296 = pneg %p128
        $region22: #{tpu_custom_call.1} parent=11 // pred_check_branch
          %298 = sbr.rel (%p296) target = $region24
        $region23: #{tpu_custom_call.1} parent=11 // pred_region
          _
        $region24: #{tpu_custom_call.1} parent=11 // pred_fallthru
          _
        // Predicated region
        $region25: #{tpu_custom_call.1} parent=11 // pred_check
          %p299 = pneg %p149
        $region26: #{tpu_custom_call.1} parent=11 // pred_check_branch
          %301 = sbr.rel (%p299) target = $region28
        $region27: #{tpu_custom_call.1} parent=11 // pred_region
          _
        $region28: #{tpu_custom_call.1} parent=11 // pred_fallthru
          _
        // Predicated region
        $region29: #{tpu_custom_call.1} parent=11 // pred_check
          %p302 = pneg %p170
        $region30: #{tpu_custom_call.1} parent=11 // pred_check_branch
          %304 = sbr.rel (%p302) target = $region32
        $region31: #{tpu_custom_call.1} parent=11 // pred_region
          _
        $region32: #{tpu_custom_call.1} parent=11 // pred_fallthru
          _
        // Predicated region
        $region33: #{tpu_custom_call.1} parent=11 // pred_check
          %p305 = pneg %p191
        $region34: #{tpu_custom_call.1} parent=11 // pred_check_branch
          %307 = sbr.rel (%p305) target = $region36
        $region35: #{tpu_custom_call.1} parent=11 // pred_region
          _
        $region36: #{tpu_custom_call.1} parent=11 // pred_fallthru
          _
      $region12: #{tpu_custom_call.1} parent=5 // pred_fallthru
        _
      %p308 = scmp.lt.s32.totalorder %s25, 2
      // Predicated region
      $region37: #{tpu_custom_call.1} parent=5 // pred_check
        %p309 = pneg %p308
      $region38: #{tpu_custom_call.1} parent=5 // pred_check_branch
        %311 = sbr.rel (%p309) target = $region40
      $region39: #{tpu_custom_call.1} parent=5 // pred_region
        // Predicated region
        $region41: #{tpu_custom_call.1} parent=39 // pred_check
          %p312 = pneg %p59
        $region42: #{tpu_custom_call.1} parent=39 // pred_check_branch
          %314 = sbr.rel (%p312) target = $region44
        $region43: #{tpu_custom_call.1} parent=39 // pred_region
          %s315 = sand.u32 %s49, 1
          %s316 = scalar_lea.sflag [#allocation3], %s315
          %s317 = sand.u32 %s49, 1
          %s318 = smul.addr %s317, 64
          %s319 = scalar_lea.vmem [#allocation2], %s318
          %s320 = smul.u32 2, %s33
          %s322 = ssub.s32 1024, 1024
          %323 = vsyncadd %s316, %s322
          %s324 = smul.addr %s32, 8
          %s325 = sadd.s32 %s320, %s324
          %s326 = smul.addr %s325, 128
          %s327 = scalar_lea.hbm %s0, %s326
          %s328 = sshll.u32 %s319, 4
          %s329 = int_to_ptr.vmem [resolvable:$true] %s328
          %334 = dma.hbm_to_vmem [thread:$0]  %s327, 1024, %s329, %s316, 256, 256, 16
        $region44: #{tpu_custom_call.1} parent=39 // pred_fallthru
          _
      $region40: #{tpu_custom_call.1} parent=5 // pred_fallthru
        _
      %p335 = scmp.le.s32.totalorder 1, %s25
      %p336 = scmp.lt.s32.totalorder %s25, 3
      %p337 = pnand %p335, %p336
      %p338 = pneg %p337
      // Predicated region
      $region45: #{tpu_custom_call.1} parent=5 // pred_check
        _
      $region46: #{tpu_custom_call.1} parent=5 // pred_check_branch
        %340 = sbr.rel (%p337) target = $region48
      $region47: #{tpu_custom_call.1} parent=5 // pred_region
        %s341 = ssub.s32 %s25, 1
        %s342 = sand.u32 %s52, 1
        %s343 = scalar_lea.sflag [#allocation3], %s342
        %s344 = sand.u32 %s52, 1
        %s345 = smul.addr %s344, 64
        %s346 = scalar_lea.vmem [#allocation2], %s345
        // Predicated region
        $region49: #{tpu_custom_call.1} parent=47 // pred_check
          %p347 = pneg %p65
        $region50: #{tpu_custom_call.1} parent=47 // pred_check_branch
          %349 = sbr.rel (%p347) target = $region52
        $region51: #{tpu_custom_call.1} parent=47 // pred_region
          %350 = dma.done %s343, 1024
        $region52: #{tpu_custom_call.1} parent=47 // pred_fallthru
          _
        %s351 = sand.u32 %s52, 1
        %s352 = scalar_lea.sflag [#allocation3], %s351
        %s353 = sand.u32 %s52, 1
        %s354 = smul.addr %s353, 64
        %s355 = scalar_lea.vmem [#allocation2], %s354
        %p356 = pneg %p65
        %p357 = pneg %p62
        %p358 = pneg %p86
        %p359 = pneg %p83
        %p360 = pneg %p107
        %p361 = pneg %p104
        %p362 = pneg %p128
        %p363 = pneg %p125
        %p364 = pneg %p149
        %p365 = pneg %p146
        %p366 = pneg %p170
        %p367 = pneg %p167
        %p368 = pneg %p191
        %p369 = pneg %p188
        %p370 = pneg %p219
        %p371 = pneg %p216
        %s372 = sand.u32 %s206, 1
        %s373 = scalar_lea.sflag [#allocation4], %s372
        %s374 = sand.u32 %s206, 1
        %s375 = smul.addr %s374, 4
        %s376 = scalar_lea.vmem [#allocation5], %s375
        %p377 = pneg %p247
        %p378 = pneg %p244
        %s379 = sand.u32 %s30, 1
        %s380 = scalar_lea.sflag [#allocation7], %s379
        %s381 = sand.u32 %s234, 1
        %s382 = smul.addr %s381, 4
        %s383 = scalar_lea.vmem [#allocation6], %s382
        %p384 = pneg %p275
        %p385 = pneg %p272
        %s386 = sand.u32 %s30, 1
        %s387 = scalar_lea.sflag [#allocation7], %s386
        %s388 = sand.u32 %s262, 1
        %s389 = smul.addr %s388, 32
        %s390 = scalar_lea.vmem [#allocation8], %s389
        %s391 = smul.u32 2, %s35
        %s392 = smul.u32 2, %s35
        %s393 = smul.u32 2, %s35
        %s394 = smul.u32 2, %s35
        %v396 = vld [vmem:[%s346] sm:$0xff]
        %v397 = vld [vmem:[%s346 + $0x8] sm:$0xff]
        %v398 = vld [vmem:[%s346 + $0x10] sm:$0xff]
        %v399 = vld [vmem:[%s346 + $0x18] sm:$0xff]
        %v400 = vld [vmem:[%s346 + $0x20] sm:$0xff]
        %v401 = vld [vmem:[%s346 + $0x28] sm:$0xff]
        %v402 = vld [vmem:[%s346 + $0x30] sm:$0xff]
        %v403 = vld [vmem:[%s346 + $0x38] sm:$0xff]
        %v404 = vpack.c.bf16 %v398, %v396
        %v405 = vpack.c.bf16 %v399, %v397
        %v406 = vpack.c.bf16 %v402, %v400
        %v407 = vpack.c.bf16 %v403, %v401
        %v408 = vld [vmem:[%s1] sm:$0x3]
        %v409 = vld [vmem:[%s2] sm:$0xf]
        %411 = vset.pattern.permute.xlu0 0
        %412 = vperm.xlu0 %411, %v409
        %v413 = vpop.permute.xlu0 %412
        %vm415 = vcmask 261120
        %v417 = vsel %vm415, %v408, 0
        %419 = vmatprep.subr.bf16.mxu0 0
        %420 = vmatpush1.bf16.msra.mxu0 0
        %421 = vmatprep.subr.bf16.mxu0 0
        %422 = vmatpush1.bf16.msra.mxu0 0
        %423 = vmatprep.subr.bf16.mxu0 0
        %424 = vmatpush1.bf16.msra.mxu0 0
        %425 = vmatprep.subr.bf16.mxu0 0
        %426 = vmatpush1.bf16.msra.mxu0 0
        %427 = vmatprep.subr.bf16.mxu0 0
        %428 = vmatpush1.bf16.msra.mxu0 0
        %429 = vmatprep.subr.bf16.mxu0 0
        %430 = vmatpush1.bf16.msra.mxu0 0
        %431 = vmatprep.subr.bf16.mxu0 %v407
        %432 = vmatpush1.bf16.msra.mxu0 %v406
        %433 = vmatprep.subr.bf16.mxu0 %v405
        %434 = vmatpush1.bf16.msra.mxu0 %v404
        %435 = vmatprep.subr.bf16.mxu0 0
        %436 = vmatpush2.bf16.msra.mxu0 0
        %437 = vmatprep.subr.bf16.mxu0 0
        %438 = vmatpush2.bf16.msra.mxu0 0
        %439 = vmatprep.subr.bf16.mxu0 0
        %440 = vmatpush2.bf16.msra.mxu0 0
        %441 = vmatprep.subr.bf16.mxu0 0
        %442 = vmatpush2.bf16.msra.mxu0 0
        %443 = vmatprep.subr.bf16.mxu0 0
        %444 = vmatpush2.bf16.msra.mxu0 0
        %445 = vmatprep.subr.bf16.mxu0 0
        %446 = vmatpush2.bf16.msra.mxu0 0
        %447 = vmatprep.subr.bf16.mxu0 0
        %448 = vmatpush2.bf16.msra.mxu0 0
        %449 = vmatprep.subr.bf16.mxu0 0
        %450 = vmatpush2.bf16.msra.mxu0 0
        %451 = vmatprep.mubr.bf16.mxu0 0
        %452 = vmatmul.mubr.bf16.gmra.mxu0 %v417
        %v453 = vpop.f32.mrf.mxu0
        %v454 = vadd.f32 %v413, %v453
        %v455 = vpop.f32.mrf.mxu0
        %v456 = vadd.f32 %v413, %v455
        %v457 = vpop.f32.mrf.mxu0
        %v458 = vpop.f32.mrf.mxu0
        %459 = vdwg.mxu0
        %v460 = vld [vmem:[%s3] sm:$0x3]
        %v461 = vld [vmem:[%s4] sm:$0xf]
        %463 = vset.pattern.permute.xlu0 0
        %464 = vperm.xlu0 %463, %v461
        %v465 = vpop.permute.xlu0 %464
        %v468 = vsel %vm415, %v460, 0
        %470 = vmatprep.subr.bf16.mxu0 0
        %471 = vmatpush1.bf16.msra.mxu0 0
        %472 = vmatprep.subr.bf16.mxu0 0
        %473 = vmatpush1.bf16.msra.mxu0 0
        %474 = vmatprep.subr.bf16.mxu0 0
        %475 = vmatpush1.bf16.msra.mxu0 0
        %476 = vmatprep.subr.bf16.mxu0 0
        %477 = vmatpush1.bf16.msra.mxu0 0
        %478 = vmatprep.subr.bf16.mxu0 0
        %479 = vmatpush1.bf16.msra.mxu0 0
        %480 = vmatprep.subr.bf16.mxu0 0
        %481 = vmatpush1.bf16.msra.mxu0 0
        %482 = vmatprep.subr.bf16.mxu0 %v407
        %483 = vmatpush1.bf16.msra.mxu0 %v406
        %484 = vmatprep.subr.bf16.mxu0 %v405
        %485 = vmatpush1.bf16.msra.mxu0 %v404
        %486 = vmatprep.subr.bf16.mxu0 0
        %487 = vmatpush2.bf16.msra.mxu0 0
        %488 = vmatprep.subr.bf16.mxu0 0
        %489 = vmatpush2.bf16.msra.mxu0 0
        %490 = vmatprep.subr.bf16.mxu0 0
        %491 = vmatpush2.bf16.msra.mxu0 0
        %492 = vmatprep.subr.bf16.mxu0 0
        %493 = vmatpush2.bf16.msra.mxu0 0
        %494 = vmatprep.subr.bf16.mxu0 0
        %495 = vmatpush2.bf16.msra.mxu0 0
        %496 = vmatprep.subr.bf16.mxu0 0
        %497 = vmatpush2.bf16.msra.mxu0 0
        %498 = vmatprep.subr.bf16.mxu0 0
        %499 = vmatpush2.bf16.msra.mxu0 0
        %500 = vmatprep.subr.bf16.mxu0 0
        %501 = vmatpush2.bf16.msra.mxu0 0
        %502 = vmatprep.mubr.bf16.mxu0 0
        %503 = vmatmul.mubr.bf16.gmra.mxu0 %v468
        %v504 = vpop.f32.mrf.mxu0
        %v505 = vadd.f32 %v465, %v504
        %v506 = vpop.f32.mrf.mxu0
        %v507 = vadd.f32 %v465, %v506
        %v508 = vpop.f32.mrf.mxu0
        %v509 = vpop.f32.mrf.mxu0
        %510 = vdwg.mxu0
        %v511 = vld [vmem:[%s5] sm:$0xf]
        %v512 = vld [vmem:[%s5 + $0x4] sm:$0xf]
        %v513 = vld [vmem:[%s5 + $0x8] sm:$0xf]
        %v514 = vld [vmem:[%s5 + $0xc] sm:$0xf]
        %v515 = vld [vmem:[%s6] sm:$0xff]
        %v516 = vld [vmem:[%s6 + $0x8] sm:$0xff]
        %v517 = vld [vmem:[%s6 + $0x10] sm:$0xff]
        %v518 = vld [vmem:[%s6 + $0x18] sm:$0xff]
        %520 = vset.pattern.permute.xlu0 0
        %521 = vperm.xlu0 %520, %v515
        %v522 = vpop.permute.xlu0 %521
        %525 = vset.pattern.permute.xlu0 0
        %526 = vperm.xlu0 %525, %v516
        %v527 = vpop.permute.xlu0 %526
        %530 = vset.pattern.permute.xlu0 0
        %531 = vperm.xlu0 %530, %v517
        %v532 = vpop.permute.xlu0 %531
        %535 = vset.pattern.permute.xlu0 0
        %536 = vperm.xlu0 %535, %v518
        %v537 = vpop.permute.xlu0 %536
        %v543 = vunpack.c.l.b16 %v511
        %v544 = vunpack.c.l.b16 %v512
        %v545 = vunpack.c.l.b16 %v513
        %v546 = vunpack.c.l.b16 %v514
        %v547 = vpack.c.b16 %v544, %v543
        %v548 = vpack.c.b16 %v546, %v545
        %v550 = vsel %vm415, %v547, 0
        %v553 = vsel %vm415, %v548, 0
        %555 = vmatprep.subr.bf16.mxu0 0
        %556 = vmatpush1.bf16.msra.mxu0 0
        %557 = vmatprep.subr.bf16.mxu0 0
        %558 = vmatpush1.bf16.msra.mxu0 0
        %559 = vmatprep.subr.bf16.mxu0 0
        %560 = vmatpush1.bf16.msra.mxu0 0
        %561 = vmatprep.subr.bf16.mxu0 0
        %562 = vmatpush1.bf16.msra.mxu0 0
        %563 = vmatprep.subr.bf16.mxu0 0
        %564 = vmatpush1.bf16.msra.mxu0 0
        %565 = vmatprep.subr.bf16.mxu0 0
        %566 = vmatpush1.bf16.msra.mxu0 0
        %567 = vmatprep.subr.bf16.mxu0 %v407
        %568 = vmatpush1.bf16.msra.mxu0 %v406
        %569 = vmatprep.subr.bf16.mxu0 %v405
        %570 = vmatpush1.bf16.msra.mxu0 %v404
        %571 = vmatprep.subr.bf16.mxu0 0
        %572 = vmatpush2.bf16.msra.mxu0 0
        %573 = vmatprep.subr.bf16.mxu0 0
        %574 = vmatpush2.bf16.msra.mxu0 0
        %575 = vmatprep.subr.bf16.mxu0 0
        %576 = vmatpush2.bf16.msra.mxu0 0
        %577 = vmatprep.subr.bf16.mxu0 0
        %578 = vmatpush2.bf16.msra.mxu0 0
        %579 = vmatprep.subr.bf16.mxu0 0
        %580 = vmatpush2.bf16.msra.mxu0 0
        %581 = vmatprep.subr.bf16.mxu0 0
        %582 = vmatpush2.bf16.msra.mxu0 0
        %583 = vmatprep.subr.bf16.mxu0 0
        %584 = vmatpush2.bf16.msra.mxu0 0
        %585 = vmatprep.subr.bf16.mxu0 0
        %586 = vmatpush2.bf16.msra.mxu0 0
        %587 = vmatprep.mubr.bf16.mxu0 0
        %588 = vmatmul.mubr.bf16.gmra.mxu0 %v550
        %v589 = vpop.f32.mrf.mxu0
        %v590 = vadd.f32 %v522, %v589
        %v591 = vpop.f32.mrf.mxu0
        %v592 = vadd.f32 %v522, %v591
        %v593 = vpop.f32.mrf.mxu0
        %v594 = vadd.f32 %v527, %v593
        %v595 = vpop.f32.mrf.mxu0
        %v596 = vadd.f32 %v527, %v595
        %597 = vmatprep.mubr.bf16.mxu0 0
        %598 = vmatmul.mubr.bf16.gmra.mxu0 %v553
        %v599 = vpop.f32.mrf.mxu0
        %v600 = vadd.f32 %v532, %v599
        %v601 = vpop.f32.mrf.mxu0
        %v602 = vadd.f32 %v532, %v601
        %v603 = vpop.f32.mrf.mxu0
        %v604 = vadd.f32 %v537, %v603
        %v605 = vpop.f32.mrf.mxu0
        %v606 = vadd.f32 %v537, %v605
        %607 = vdwg.mxu0
        %v608 = vpack.c.bf16 %v454, %v454
        %v609 = vpack.c.bf16 %v456, %v456
        %v612 = vcombine.low %v608, %v609
        %v614 = vunpack.c.l.s4 1983009808
        %v615 = vunpack.c.0.s8 %v614
        %v616 = vlaneseq
        %v617 = vshrl.u32 %v616, 7
        %v618 = vsub.s32 %v615, %v617
        %v619 = vrot.slane %v612, %v618
        %621 = vst [vmem:[%s376] sm:$0xf] %v619
        %v622 = vpack.c.bf16 %v505, %v505
        %v623 = vpack.c.bf16 %v507, %v507
        %v626 = vcombine.low %v622, %v623
        %v628 = vunpack.c.l.s4 1983009808
        %v629 = vunpack.c.0.s8 %v628
        %v630 = vlaneseq
        %v631 = vshrl.u32 %v630, 7
        %v632 = vsub.s32 %v629, %v631
        %v633 = vrot.slane %v626, %v632
        %635 = vst [vmem:[%s383] sm:$0xf] %v633
        %v636 = vpack.c.bf16 %v594, %v590
        %v637 = vpack.c.bf16 %v596, %v592
        %v638 = vpack.c.bf16 %v604, %v600
        %v639 = vpack.c.bf16 %v606, %v602
        %v644 = vunpack.c.l.b16 %v636
        %v645 = vunpack.c.l.b16 %v637
        %v646 = vunpack.c.h.b16 %v636
        %v647 = vunpack.c.h.b16 %v637
        %v648 = vunpack.c.l.b16 %v638
        %v649 = vunpack.c.l.b16 %v639
        %v650 = vunpack.c.h.b16 %v638
        %v651 = vunpack.c.h.b16 %v639
        %v652 = vpack.c.b16 %v645, %v644
        %v653 = vpack.c.b16 %v647, %v646
        %v654 = vpack.c.b16 %v649, %v648
        %v655 = vpack.c.b16 %v651, %v650
        %660 = vst [vmem:[%s390] sm:$0xff] %v652
        %661 = vst [vmem:[%s390 + $0x8] sm:$0xff] %v653
        %662 = vst [vmem:[%s390 + $0x10] sm:$0xff] %v654
        %663 = vst [vmem:[%s390 + $0x18] sm:$0xff] %v655
        %s664 = sand.u32 %s206, 1
        %s665 = scalar_lea.sflag [#allocation4], %s664
        %s666 = sand.u32 %s206, 1
        %s667 = smul.addr %s666, 4
        %s668 = scalar_lea.vmem [#allocation5], %s667
        %s669 = sand.u32 %s30, 1
        %s670 = scalar_lea.sflag [#allocation7], %s669
        %s671 = sand.u32 %s234, 1
        %s672 = smul.addr %s671, 4
        %s673 = scalar_lea.vmem [#allocation6], %s672
        %s674 = sand.u32 %s30, 1
        %s675 = scalar_lea.sflag [#allocation7], %s674
        %s676 = sand.u32 %s262, 1
        %s677 = smul.addr %s676, 32
        %s678 = scalar_lea.vmem [#allocation8], %s677
        // Predicated region
        $region53: #{tpu_custom_call.1} parent=47 // pred_check
          %p679 = pneg %p216
        $region54: #{tpu_custom_call.1} parent=47 // pred_check_branch
          %681 = sbr.rel (%p679) target = $region56
        $region55: #{tpu_custom_call.1} parent=47 // pred_region
          %s682 = smul.u32 2, %s35
          %s684 = ssub.s32 64, 64
          %685 = vsyncadd %s665, %s684
          %s686 = smul.addr %s34, 2
          %s687 = sadd.s32 %s682, %s686
          %s688 = smul.addr %s687, 32
          %s689 = scalar_lea.hbm %s7, %s688
          %s691 = sshll.u32 %s668, 4
          %s692 = int_to_ptr.vmem [resolvable:$true] %s691
          %694 = dma.vmem_to_hbm [thread:$0]  %s692, 64, %s689, %s665
        $region56: #{tpu_custom_call.1} parent=47 // pred_fallthru
          _
        // Predicated region
        $region57: #{tpu_custom_call.1} parent=47 // pred_check
          %p695 = pneg %p244
        $region58: #{tpu_custom_call.1} parent=47 // pred_check_branch
          %697 = sbr.rel (%p695) target = $region60
        $region59: #{tpu_custom_call.1} parent=47 // pred_region
          %s698 = smul.u32 2, %s35
          %s700 = ssub.s32 64, 64
          %701 = vsyncadd %s670, %s700
          %s702 = smul.addr %s34, 2
          %s703 = sadd.s32 %s698, %s702
          %s704 = smul.addr %s703, 32
          %s705 = scalar_lea.hbm %s8, %s704
          %s707 = sshll.u32 %s673, 4
          %s708 = int_to_ptr.vmem [resolvable:$true] %s707
          %710 = dma.vmem_to_hbm [thread:$0]  %s708, 64, %s705, %s670
        $region60: #{tpu_custom_call.1} parent=47 // pred_fallthru
          _
        // Predicated region
        $region61: #{tpu_custom_call.1} parent=47 // pred_check
          %p711 = pneg %p272
        $region62: #{tpu_custom_call.1} parent=47 // pred_check_branch
          %713 = sbr.rel (%p711) target = $region64
        $region63: #{tpu_custom_call.1} parent=47 // pred_region
          %s714 = smul.u32 2, %s35
          %s716 = ssub.s32 512, 512
          %717 = vsyncadd %s675, %s716
          %s718 = smul.addr %s34, 8
          %s719 = sadd.s32 %s714, %s718
          %s720 = smul.addr %s719, 64
          %s721 = scalar_lea.hbm %s9, %s720
          %s722 = sshll.u32 %s678, 4
          %s723 = int_to_ptr.vmem [resolvable:$true] %s722
          %728 = dma.vmem_to_hbm [thread:$0]  %s723, 512, %s721, %s675, 128, 128, 8
        $region64: #{tpu_custom_call.1} parent=47 // pred_fallthru
          _
      $region48: #{tpu_custom_call.1} parent=5 // pred_fallthru
        _
      %p729 = scmp.le.s32.totalorder 2, %s25
      // Predicated region
      $region65: #{tpu_custom_call.1} parent=5 // pred_check
        %p730 = pneg %p729
      $region66: #{tpu_custom_call.1} parent=5 // pred_check_branch
        %732 = sbr.rel (%p730) target = $region68
      $region67: #{tpu_custom_call.1} parent=5 // pred_region
        %s733 = ssub.s32 %s25, 2
        // Predicated region
        $region69: #{tpu_custom_call.1} parent=67 // pred_check
          %p734 = pneg %p222
        $region70: #{tpu_custom_call.1} parent=67 // pred_check_branch
          %736 = sbr.rel (%p734) target = $region72
        $region71: #{tpu_custom_call.1} parent=67 // pred_region
          %s737 = sand.u32 %s207, 1
          %s738 = scalar_lea.sflag [#allocation4], %s737
          %s739 = sand.u32 %s207, 1
          %s740 = smul.addr %s739, 4
          %s741 = scalar_lea.vmem [#allocation5], %s740
          %742 = dma.done %s738, 64
        $region72: #{tpu_custom_call.1} parent=67 // pred_fallthru
          _
        // Predicated region
        $region73: #{tpu_custom_call.1} parent=67 // pred_check
          %p743 = pneg %p250
        $region74: #{tpu_custom_call.1} parent=67 // pred_check_branch
          %745 = sbr.rel (%p743) target = $region76
        $region75: #{tpu_custom_call.1} parent=67 // pred_region
          %s746 = sand.u32 %s31, 1
          %s747 = scalar_lea.sflag [#allocation7], %s746
          %s748 = sand.u32 %s235, 1
          %s749 = smul.addr %s748, 4
          %s750 = scalar_lea.vmem [#allocation6], %s749
          %751 = dma.done %s747, 64
        $region76: #{tpu_custom_call.1} parent=67 // pred_fallthru
          _
        // Predicated region
        $region77: #{tpu_custom_call.1} parent=67 // pred_check
          %p752 = pneg %p278
        $region78: #{tpu_custom_call.1} parent=67 // pred_check_branch
          %754 = sbr.rel (%p752) target = $region80
        $region79: #{tpu_custom_call.1} parent=67 // pred_region
          %s755 = sand.u32 %s31, 1
          %s756 = scalar_lea.sflag [#allocation7], %s755
          %s757 = sand.u32 %s263, 1
          %s758 = smul.addr %s757, 32
          %s759 = scalar_lea.vmem [#allocation8], %s758
          %760 = dma.done %s756, 512
        $region80: #{tpu_custom_call.1} parent=67 // pred_fallthru
          _
      $region68: #{tpu_custom_call.1} parent=5 // pred_fallthru
        _
    $region6: #{tpu_custom_call.1} parent=1 // loop_footer
      %s29 = sadd.s32 1, %s25
    $region7: #{tpu_custom_call.1} parent=1 // loop_footer_branch
      %24 = sbr.rel target = $region3
    $region8: #{tpu_custom_call.1} parent=1 // loop_exit
      _
    %761 = vsyncpa [#allocation3], 1
    %s762 = scalar_lea.sflag [#allocation3], 1
    %763 = vsyncpa %s762, 1
    %764 = vsyncpa [#allocation4], 1
    %s765 = scalar_lea.sflag [#allocation4], 1
    %766 = vsyncpa %s765, 1
    %767 = vsyncpa [#allocation7], 1
    %s768 = scalar_lea.sflag [#allocation7], 1
    %769 = vsyncpa %s768, 1

</llo_original>
